<compile_context>
chip_gen: v6e
topology: v6e:2x2x1
jax: 0.10.0
libtpu: 0.0.40
codegen_flags: <defaults>
</compile_context>

<pallas_src>
import jax
import jax.numpy as jnp
from jax.experimental import pallas as pl
from jax.experimental.pallas import tpu as pltpu


def _round_up(x, m):
    return ((x + m - 1) // m) * m


def _gcn_kernel(x_ref, adj_ref, w_ref, b_ref, o_ref, support_ref):
    # x_ref:       (N_pad, F_in)   compute dtype, full node set for this batch
    # adj_ref:     (TM, N_pad)     compute dtype, one row tile of adjacency
    # w_ref:       (F_in, F_pad)   compute dtype, shared
    # b_ref:       (1, F_pad)      float32 (zeros when bias is None)
    # o_ref:       (TM, F_pad)     float32
    # support_ref: (N_pad, F_pad)  compute dtype VMEM scratch (persists per batch)

    # Compute support = x @ w once per batch (row-tile index 0 of each batch).
    @pl.when(pl.program_id(1) == 0)
    def _():
        s = jnp.dot(x_ref[...], w_ref[...], preferred_element_type=jnp.float32)
        support_ref[...] = s.astype(support_ref.dtype)

    # output tile = adj_tile @ support  (MXU, f32 accumulation)
    out = jnp.dot(adj_ref[...], support_ref[...],
                  preferred_element_type=jnp.float32)
    out = out + b_ref[...]                       # bias (zeros if disabled)
    # LeakyReLU(negative_slope=0.2) in f32 on the VPU
    out = jnp.where(out >= 0, out, 0.2 * out)
    o_ref[...] = out.astype(o_ref.dtype)


def graph_convolution(x, adj, weight, bias=None, *,
                      compute_dtype=jnp.bfloat16, tm_max=256):
    """x: [B, N, F_in], adj: [B, N, N], weight: [F_in, F_out] -> [B, N, F_out]."""
    B, N, F_in = x.shape
    F_out = weight.shape[1]

    # ---- padding / tiling decisions -------------------------------------
    F_pad = _round_up(F_out, 128)          # lane-dense output / full MXU cols
    if N <= tm_max:
        N_pad = _round_up(N, 8)
        TM = N_pad                          # single row tile
    else:
        TM = tm_max                         # 128-aligned, fits v5e/v6e/v7x MXU
        N_pad = _round_up(N, TM)
    num_tiles = N_pad // TM

    # ---- parameter / input preparation ----------------------------------
    weight = weight.astype(jnp.float32)     # matches `self.weight.float()`
    w_p = jnp.zeros((F_in, F_pad), jnp.float32).at[:, :F_out].set(weight)
    b_p = jnp.zeros((1, F_pad), jnp.float32)
    if bias is not None:
        b_p = b_p.at[0, :F_out].set(bias.astype(jnp.float32))

    x_p, adj_p = x, adj
    if N_pad != N:
        x_p = jnp.pad(x_p, ((0, 0), (0, N_pad - N), (0, 0)))
        adj_p = jnp.pad(adj_p, ((0, 0), (0, N_pad - N), (0, N_pad - N)))

    x_p = x_p.astype(compute_dtype)
    adj_p = adj_p.astype(compute_dtype)
    w_p = w_p.astype(compute_dtype)

    # ---- cost estimate (scheduling hint for XLA) -------------------------
    flops = 2 * B * N_pad * F_in * F_pad + 2 * B * N_pad * N_pad * F_pad
    bytes_accessed = (
        x_p.size * x_p.dtype.itemsize
        + adj_p.size * adj_p.dtype.itemsize
        + w_p.size * w_p.dtype.itemsize
        + b_p.size * b_p.dtype.itemsize
        + B * N_pad * F_pad * 4
    )
    cost = pl.CostEstimate(flops=flops, transcendentals=0,
                           bytes_accessed=bytes_accessed)

    out = pl.pallas_call(
        _gcn_kernel,
        out_shape=jax.ShapeDtypeStruct((B, N_pad, F_pad), jnp.float32),
        grid_spec=pltpu.PrefetchScalarGridSpec(
            num_scalar_prefetch=0,
            grid=(B, num_tiles),
            in_specs=[
                # x: full node set per batch (re-DMA'd only when b changes)
                pl.BlockSpec((pl.Squeezed(), N_pad, F_in),
                             lambda b, j: (b, 0, 0)),
                # adj: one (TM, N_pad) row tile per grid step
                pl.BlockSpec((pl.Squeezed(), TM, N_pad),
                             lambda b, j: (b, j, 0)),
                # weight and bias: resident (index map constant)
                pl.BlockSpec((F_in, F_pad), lambda b, j: (0, 0)),
                pl.BlockSpec((1, F_pad), lambda b, j: (0, 0)),
            ],
            out_specs=pl.BlockSpec((pl.Squeezed(), TM, F_pad),
                                   lambda b, j: (b, j, 0)),
            scratch_shapes=[pltpu.VMEM((N_pad, F_pad), compute_dtype)],
        ),
        compiler_params=pltpu.CompilerParams(
            # Row-tile axis must stay sequential per batch (support scratch is
            # initialized at j == 0); batch axis carries megacore parallelism.
            dimension_semantics=("parallel", "arbitrary"),
            vmem_limit_bytes=48 * 1024 * 1024,
        ),
        cost_estimate=cost,
    )(x_p, adj_p, w_p, b_p)

    return out[:, :N, :F_out]


def init_params(key, in_features, out_features, bias=False):
    # reset_parameters: uniform(-stdv, stdv) with stdv = 1/sqrt(out_features)
    stdv = 1.0 / (out_features ** 0.5)
    kw, kb = jax.random.split(key)
    weight = jax.random.uniform(
        kw, (in_features, out_features), jnp.float32, -stdv, stdv
    )
    b = None
    if bias:
        b = jax.random.uniform(kb, (out_features,), jnp.float32, -stdv, stdv)
    return weight, b


if __name__ == "__main__":
    B, N, F_in, F_out = 2, 64, 32, 32

    key = jax.random.PRNGKey(0)
    kx, ka, kp = jax.random.split(key, 3)

    x = jax.random.normal(kx, (B, N, F_in), jnp.float32)
    # simple symmetric normalized-ish adjacency (dense, deterministic)
    a_raw = jax.random.uniform(ka, (B, N, N), jnp.float32)
    adj = (a_raw + jnp.swapaxes(a_raw, -1, -2)) / (2.0 * N)

    weight, _ = init_params(kp, F_in, F_out, bias=False)

    # reference in plain JAX (f32 math, eval-mode dropout = identity)
    ref = jnp.matmul(adj, jnp.matmul(x, weight))
    ref = jnp.where(ref >= 0, ref, 0.2 * ref)

    # 1) f32 compute path: tight check against the f32 reference
    out_f32 = jax.block_until_ready(
        graph_convolution(x, adj, weight, compute_dtype=jnp.float32))
    assert out_f32.shape == (B, N, F_out)
    assert jnp.allclose(out_f32, ref, atol=1e-4, rtol=1e-4)

    # 2) default bf16 streaming path (f32 accumulation): loose check
    out_bf16 = jax.block_until_ready(graph_convolution(x, adj, weight))
    assert out_bf16.shape == (B, N, F_out)
    assert jnp.allclose(out_bf16, ref, atol=2e-2, rtol=2e-2)

    print("KERNEL_OK")
</pallas_src>

<mosaic_0001>
module attributes {stable_mosaic.version = 11 : i64} {
  func.func @_gcn_kernel(%arg0: i32, %arg1: i32, %arg2: memref<1x64x32xf32, #tpu.memory_space<vmem>>, %arg3: memref<1x64x64xf32, #tpu.memory_space<vmem>>, %arg4: memref<32x128xf32, #tpu.memory_space<vmem>>, %arg5: memref<1x128xf32, #tpu.memory_space<vmem>>, %arg6: memref<1x64x128xf32, #tpu.memory_space<vmem>>, %arg7: memref<64x128xf32, #tpu.memory_space<vmem>>) attributes {dimension_semantics = [#tpu.dimension_semantics<parallel>, #tpu.dimension_semantics<arbitrary>], iteration_bounds = array<i64: 2, 1>, scalar_prefetch = 0 : i64, scratch_operands = 1 : i64, tpu.core_type = #tpu.core_type<tc>, window_params = [{transform_indices = @transform_0, window_bounds = array<i64: 1, 64, 32>}, {transform_indices = @transform_1, window_bounds = array<i64: 1, 64, 64>}, {pipeline_mode = #tpu.pipeline_mode<synchronous>, transform_indices = @transform_2, window_bounds = array<i64: 32, 128>}, {pipeline_mode = #tpu.pipeline_mode<synchronous>, transform_indices = @transform_3, window_bounds = array<i64: 1, 128>}, {transform_indices = @transform_4, window_bounds = array<i64: 1, 64, 128>}]} {
    %c0_i32 = arith.constant 0 : i32
    %0 = arith.cmpi eq, %arg1, %c0_i32 : i32
    %1 = arith.extui %0 : i1 to i32
    %c0_i32_0 = arith.constant 0 : i32
    %2 = arith.cmpi ne, %1, %c0_i32_0 : i32
    scf.if %2 {
      %c0_12 = arith.constant 0 : index
      %c0_13 = arith.constant 0 : index
      %c0_14 = arith.constant 0 : index
      %18 = vector.load %arg2[%c0_12, %c0_13, %c0_14] : memref<1x64x32xf32, #tpu.memory_space<vmem>>, vector<1x64x32xf32>
      %19 = vector.shape_cast %18 : vector<1x64x32xf32> to vector<64x32xf32>
      %c0_15 = arith.constant 0 : index
      %c0_16 = arith.constant 0 : index
      %20 = vector.load %arg4[%c0_15, %c0_16] : memref<32x128xf32, #tpu.memory_space<vmem>>, vector<32x128xf32>
      %cst_17 = arith.constant dense<0.000000e+00> : vector<64x128xf32>
      %21 = tpu.matmul %19, %20, %cst_17 {dimension_numbers = #tpu.dot_dimension_numbers<[1], [0], [0], [1], [0, 0, 1, 1], [], []>} : vector<64x32xf32>, vector<32x128xf32>, vector<64x128xf32> -> vector<64x128xf32>
      %c0_18 = arith.constant 0 : index
      %c0_19 = arith.constant 0 : index
      %22 = vector.load %arg7[%c0_18, %c0_19] : memref<64x128xf32, #tpu.memory_space<vmem>>, vector<64x128xf32>
      tpu.vector_store %arg7[%c0_18, %c0_19], %21 {strides = array<i32>} : memref<64x128xf32, #tpu.memory_space<vmem>>, vector<64x128xf32>,
    } else {
    }
    %c0 = arith.constant 0 : index
    %c0_1 = arith.constant 0 : index
    %c0_2 = arith.constant 0 : index
    %3 = vector.load %arg3[%c0, %c0_1, %c0_2] : memref<1x64x64xf32, #tpu.memory_space<vmem>>, vector<1x64x64xf32>
    %4 = vector.shape_cast %3 : vector<1x64x64xf32> to vector<64x64xf32>
    %c0_3 = arith.constant 0 : index
    %c0_4 = arith.constant 0 : index
    %5 = vector.load %arg7[%c0_3, %c0_4] : memref<64x128xf32, #tpu.memory_space<vmem>>, vector<64x128xf32>
    %cst = arith.constant dense<0.000000e+00> : vector<64x128xf32>
    %6 = tpu.matmul %4, %5, %cst {dimension_numbers = #tpu.dot_dimension_numbers<[1], [0], [0], [1], [0, 0, 1, 1], [], []>} : vector<64x64xf32>, vector<64x128xf32>, vector<64x128xf32> -> vector<64x128xf32>
    %c0_5 = arith.constant 0 : index
    %c0_6 = arith.constant 0 : index
    %7 = vector.load %arg5[%c0_5, %c0_6] : memref<1x128xf32, #tpu.memory_space<vmem>>, vector<1x128xf32>
    %8 = vector.broadcast %7 : vector<1x128xf32> to vector<64x128xf32>
    %9 = arith.addf %6, %8 : vector<64x128xf32>
    %cst_7 = arith.constant 0.000000e+00 : f32
    %10 = vector.broadcast %cst_7 : f32 to vector<64x128xf32>
    %11 = arith.cmpf oge, %9, %10 : vector<64x128xf32>
    %cst_8 = arith.constant 2.000000e-01 : f32
    %12 = vector.broadcast %cst_8 : f32 to vector<64x128xf32>
    %13 = arith.mulf %12, %9 : vector<64x128xf32>
    %14 = arith.select %11, %9, %13 : vector<64x128xi1>, vector<64x128xf32>
    %c0_9 = arith.constant 0 : index
    %c0_10 = arith.constant 0 : index
    %c0_11 = arith.constant 0 : index
    %15 = vector.load %arg6[%c0_9, %c0_10, %c0_11] : memref<1x64x128xf32, #tpu.memory_space<vmem>>, vector<1x64x128xf32>
    %16 = vector.shape_cast %15 : vector<1x64x128xf32> to vector<64x128xf32>
    %17 = vector.shape_cast %14 : vector<64x128xf32> to vector<1x64x128xf32>
    tpu.vector_store %arg6[%c0_9, %c0_10, %c0_11], %17 {strides = array<i32>} : memref<1x64x128xf32, #tpu.memory_space<vmem>>, vector<1x64x128xf32>,
    return
  }
  func.func @transform_0(%arg0: i32, %arg1: i32) -> (i32, i32, i32) {
    %c0_i32 = arith.constant 0 : i32
    %c0_i32_0 = arith.constant 0 : i32
    %c0_i32_1 = arith.constant 0 : i32
    return %arg0, %c0_i32, %c0_i32_0 : i32, i32, i32
  }
  func.func @transform_1(%arg0: i32, %arg1: i32) -> (i32, i32, i32) {
    %c0_i32 = arith.constant 0 : i32
    %c0_i32_0 = arith.constant 0 : i32
    return %arg0, %arg1, %c0_i32 : i32, i32, i32
  }
  func.func @transform_2(%arg0: i32, %arg1: i32) -> (i32, i32) {
    %c0_i32 = arith.constant 0 : i32
    %c0_i32_0 = arith.constant 0 : i32
    %c0_i32_1 = arith.constant 0 : i32
    return %c0_i32, %c0_i32_0 : i32, i32
  }
  func.func @transform_3(%arg0: i32, %arg1: i32) -> (i32, i32) {
    %c0_i32 = arith.constant 0 : i32
    %c0_i32_0 = arith.constant 0 : i32
    %c0_i32_1 = arith.constant 0 : i32
    return %c0_i32, %c0_i32_0 : i32, i32
  }
  func.func @transform_4(%arg0: i32, %arg1: i32) -> (i32, i32, i32) {
    %c0_i32 = arith.constant 0 : i32
    %c0_i32_0 = arith.constant 0 : i32
    return %arg0, %arg1, %c0_i32 : i32, i32, i32
  }
}

</mosaic_0001>

<llo_original>
// kernel: tpu_custom_call.1
$region0: #{tpu_custom_call.1}
  #allocation0 [shape = 'u32[]', space=smem, size = 0x4, offset = 0x4, fixed_abs, tag = 'smem constant byte address 0x4 - core index']
  #allocation1 [shape = 'u32[144,128]{1,0:T(1,128)}', space=vmem, size = 0x12000, scoped, tag = 'internal scratch']
  #allocation2 [shape = 'f32[64,128]{1,0:T(8,128)}', space=vmem, size = 0x8000, scoped, tag = 'scratch operand']
  %s0 = inlined_call_operand.vmem [shape: f32[2,64,32], index: 0, kind: input, shape index: {}]
  %s1 = inlined_call_operand.vmem [shape: f32[2,64,64], index: 1, kind: input, shape index: {}]
  %s2 = inlined_call_operand.vmem [shape: f32[32,128], index: 2, kind: input, shape index: {}]
  %s3 = inlined_call_operand.vmem [shape: f32[1,128], index: 3, kind: input, shape index: {}]
  %s4 = inlined_call_operand.hbm [shape: f32[2,64,128], index: 4, kind: output, shape index: {}]
  %s5 = sld [smem:[#allocation0]]
  $region53: #{tpu_custom_call.1} parent=0
    _
  %s7 = ssub.s32 1, %s5
  %s8 = scalar_select 0, %s7, %s5
  $region1: #{tpu_custom_call.1} parent=0
    #allocation3 [shape = 'u8[65536]{0}', space=vmem, size = 0x10000, scoped, tag = 'output window, operand 0']
    #allocation4 [shape = 's32[2]{0}', space=sflag, size = 0x8, scoped, tag = 'scoped memory for tpu_custom_call.1']
    %9 = vsyncpa [#allocation4], 0
    %s10 = scalar_lea.sflag [#allocation4], 1
    %11 = vsyncpa %s10, 0
    loop: start=0, step=1, limit=4
    $region2: #{tpu_custom_call.1} parent=1 // loop_pre_header
      _
    $region3: #{tpu_custom_call.1} parent=1 // loop_header
      %s13 = sphi 0, %s17
      %p14 = scmp.ge.s32.totalorder %s13, 4
      %s20 = sphi 0, %s32
      %s21 = sphi 0, %s28
      %s22 = sphi 0, %s20
      %s23 = sphi 0, %s21
      %s24 = sphi 0, %s22
      %s25 = sphi 0, %s23
      %s35 = sphi 0, %s37
      %s38 = sphi 0, %s35
      %s39 = sphi 0, %s38
      %s55 = sphi 0, %s39
      %s63 = sphi 0, %s65
      %s66 = sphi 0, %s63
      %s67 = sphi 0, %s66
      %s83 = sphi 0, %s67
      %s87 = sphi 0, %s87
      %s89 = sphi 0, %s87
      %s90 = sphi 0, %s89
      %s104 = sphi 0, %s90
      %s108 = sphi 0, %s108
      %s110 = sphi 0, %s108
      %s111 = sphi 0, %s110
      %s125 = sphi 0, %s111
      %s133 = sphi 0, %s135
      %s136 = sphi 0, %s133
      %s137 = sphi 0, %s136
      %s153 = sphi 0, %s137
    $region4: #{tpu_custom_call.1} parent=1 // loop_header_branch
      %16 = sbr.rel (%p14) target = $region8
    $region5: #{tpu_custom_call.1} parent=1 // loop_body
      %s18 = ssub.s32 %s13, 1
      %s19 = ssub.s32 %s13, 2
      %s26 = sadd.s32 1, %s21
      %p27 = scmp.ge.s32.totalorder %s26, 1
      %s28 = scalar_select %p27, 0, %s26
      %s29 = sadd.s32 1, %s20
      %s30 = scalar_select %p27, %s29, %s20
      %p31 = scmp.ge.s32.totalorder %s30, 2
      %s32 = scalar_select %p31, 0, %s30
      %s33 = ssub.s32 %s20, %s32
      %p34 = scmp.eq.s32.totalorder %s33, 0
      %s36 = sadd.s32 %s35, 1
      %s37 = scalar_select %p34, %s35, %s36
      %p40 = pneg %p34
      %p41 = scmp.eq.s32.totalorder %s13, 1
      %p42 = por %p40, %p41
      %p43 = scmp.ne.s32.totalorder %s35, %s38
      %p44 = scmp.eq.s32.totalorder %s13, 0
      %p45 = por %p43, %p44
      %p46 = scmp.ne.s32.totalorder %s35, %s38
      %p47 = scmp.eq.s32.totalorder %s18, 1
      %p48 = por %p46, %p47
      %p49 = scmp.ne.s32.totalorder %s38, %s39
      %p50 = scmp.eq.s32.totalorder %s18, 0
      %p51 = por %p49, %p50
      %p52 = scmp.ne.s32.totalorder %s38, %s39
      %p53 = scmp.eq.s32.totalorder %s19, 1
      %p54 = por %p52, %p53
      %p56 = scmp.ne.s32.totalorder %s39, %s55
      %p57 = scmp.eq.s32.totalorder %s19, 0
      %p58 = por %p56, %p57
      %s59 = ssub.s32 %s20, %s32
      %s60 = ssub.s32 %s21, %s28
      %s61 = sor.u32 %s59, %s60
      %p62 = scmp.eq.s32.totalorder %s61, 0
      %s64 = sadd.s32 %s63, 1
      %s65 = scalar_select %p62, %s63, %s64
      %p68 = pneg %p62
      %p69 = scmp.eq.s32.totalorder %s13, 1
      %p70 = por %p68, %p69
      %p71 = scmp.ne.s32.totalorder %s63, %s66
      %p72 = scmp.eq.s32.totalorder %s13, 0
      %p73 = por %p71, %p72
      %p74 = scmp.ne.s32.totalorder %s63, %s66
      %p75 = scmp.eq.s32.totalorder %s18, 1
      %p76 = por %p74, %p75
      %p77 = scmp.ne.s32.totalorder %s66, %s67
      %p78 = scmp.eq.s32.totalorder %s18, 0
      %p79 = por %p77, %p78
      %p80 = scmp.ne.s32.totalorder %s66, %s67
      %p81 = scmp.eq.s32.totalorder %s19, 1
      %p82 = por %p80, %p81
      %p84 = scmp.ne.s32.totalorder %s67, %s83
      %p85 = scmp.eq.s32.totalorder %s19, 0
      %p86 = por %p84, %p85
      %s88 = sadd.s32 %s87, 1
      %p91 = scmp.eq.s32.totalorder %s13, 1
      %p92 = scmp.ne.s32.totalorder %s87, %s89
      %p93 = scmp.eq.s32.totalorder %s13, 0
      %p94 = por %p92, %p93
      %p95 = scmp.ne.s32.totalorder %s87, %s89
      %p96 = scmp.eq.s32.totalorder %s18, 1
      %p97 = por %p95, %p96
      %p98 = scmp.ne.s32.totalorder %s89, %s90
      %p99 = scmp.eq.s32.totalorder %s18, 0
      %p100 = por %p98, %p99
      %p101 = scmp.ne.s32.totalorder %s89, %s90
      %p102 = scmp.eq.s32.totalorder %s19, 1
      %p103 = por %p101, %p102
      %p105 = scmp.ne.s32.totalorder %s90, %s104
      %p106 = scmp.eq.s32.totalorder %s19, 0
      %p107 = por %p105, %p106
      %s109 = sadd.s32 %s108, 1
      %p112 = scmp.eq.s32.totalorder %s13, 1
      %p113 = scmp.ne.s32.totalorder %s108, %s110
      %p114 = scmp.eq.s32.totalorder %s13, 0
      %p115 = por %p113, %p114
      %p116 = scmp.ne.s32.totalorder %s108, %s110
      %p117 = scmp.eq.s32.totalorder %s18, 1
      %p118 = por %p116, %p117
      %p119 = scmp.ne.s32.totalorder %s110, %s111
      %p120 = scmp.eq.s32.totalorder %s18, 0
      %p121 = por %p119, %p120
      %p122 = scmp.ne.s32.totalorder %s110, %s111
      %p123 = scmp.eq.s32.totalorder %s19, 1
      %p124 = por %p122, %p123
      %p126 = scmp.ne.s32.totalorder %s111, %s125
      %p127 = scmp.eq.s32.totalorder %s19, 0
      %p128 = por %p126, %p127
      %s129 = ssub.s32 %s20, %s32
      %s130 = ssub.s32 %s21, %s28
      %s131 = sor.u32 %s129, %s130
      %p132 = scmp.eq.s32.totalorder %s131, 0
      %s134 = sadd.s32 %s133, 1
      %s135 = scalar_select %p132, %s133, %s134
      %p138 = pneg %p132
      %p139 = scmp.eq.s32.totalorder %s13, 1
      %p140 = por %p138, %p139
      %p141 = scmp.ne.s32.totalorder %s133, %s136
      %p142 = scmp.eq.s32.totalorder %s13, 0
      %p143 = por %p141, %p142
      %p144 = scmp.ne.s32.totalorder %s133, %s136
      %p145 = scmp.eq.s32.totalorder %s18, 1
      %p146 = por %p144, %p145
      %p147 = scmp.ne.s32.totalorder %s136, %s137
      %p148 = scmp.eq.s32.totalorder %s18, 0
      %p149 = por %p147, %p148
      %p150 = scmp.ne.s32.totalorder %s136, %s137
      %p151 = scmp.eq.s32.totalorder %s19, 1
      %p152 = por %p150, %p151
      %p154 = scmp.ne.s32.totalorder %s137, %s153
      %p155 = scmp.eq.s32.totalorder %s19, 0
      %p156 = por %p154, %p155
      %p157 = scmp.le.s32.totalorder 1, %s13
      %p158 = scmp.lt.s32.totalorder %s13, 3
      %p159 = pnand %p157, %p158
      %p160 = pneg %p159
      // Predicated region
      $region9: #{tpu_custom_call.1} parent=5 // pred_check
        _
      $region10: #{tpu_custom_call.1} parent=5 // pred_check_branch
        %162 = sbr.rel (%p159) target = $region12
      $region11: #{tpu_custom_call.1} parent=5 // pred_region
        %s163 = ssub.s32 %s13, 1
        // Predicated region
        $region13: #{tpu_custom_call.1} parent=11 // pred_check
          %p164 = pneg %p100
        $region14: #{tpu_custom_call.1} parent=11 // pred_check_branch
          %166 = sbr.rel (%p164) target = $region16
        $region15: #{tpu_custom_call.1} parent=11 // pred_region
          _
        $region16: #{tpu_custom_call.1} parent=11 // pred_fallthru
          _
        // Predicated region
        $region17: #{tpu_custom_call.1} parent=11 // pred_check
          %p167 = pneg %p121
        $region18: #{tpu_custom_call.1} parent=11 // pred_check_branch
          %169 = sbr.rel (%p167) target = $region20
        $region19: #{tpu_custom_call.1} parent=11 // pred_region
          _
        $region20: #{tpu_custom_call.1} parent=11 // pred_fallthru
          _
      $region12: #{tpu_custom_call.1} parent=5 // pred_fallthru
        _
      %p170 = scmp.lt.s32.totalorder %s13, 2
      // Predicated region
      $region21: #{tpu_custom_call.1} parent=5 // pred_check
        %p171 = pneg %p170
      $region22: #{tpu_custom_call.1} parent=5 // pred_check_branch
        %173 = sbr.rel (%p171) target = $region24
      $region23: #{tpu_custom_call.1} parent=5 // pred_region
        // Predicated region
        $region25: #{tpu_custom_call.1} parent=23 // pred_check
          %p174 = pneg %p45
        $region26: #{tpu_custom_call.1} parent=23 // pred_check_branch
          %176 = sbr.rel (%p174) target = $region28
        $region27: #{tpu_custom_call.1} parent=23 // pred_region
          %p177 = scmp.lt.s32.totalorder %s20, 1
          %s178 = scalar_select %p177, %s20, 1
          %s179 = smul.addr %s178, 8
          %s180 = smul.addr %s179, 8
          %s181 = scalar_lea.vmem %s0, %s180
        $region28: #{tpu_custom_call.1} parent=23 // pred_fallthru
          _
        // Predicated region
        $region29: #{tpu_custom_call.1} parent=23 // pred_check
          %p182 = pneg %p73
        $region30: #{tpu_custom_call.1} parent=23 // pred_check_branch
          %184 = sbr.rel (%p182) target = $region32
        $region31: #{tpu_custom_call.1} parent=23 // pred_region
          %s185 = smul.u32 8, %s21
          %p186 = scmp.lt.s32.totalorder %s20, 1
          %s187 = scalar_select %p186, %s20, 1
          %p188 = scmp.lt.s32.totalorder %s185, 7
          %s189 = scalar_select %p188, %s185, 7
          %s190 = smul.addr %s187, 8
          %s191 = sadd.s32 %s189, %s190
          %s192 = smul.addr %s191, 8
          %s193 = scalar_lea.vmem %s1, %s192
          %s194 = smul.u32 8, %s21
        $region32: #{tpu_custom_call.1} parent=23 // pred_fallthru
          _
      $region24: #{tpu_custom_call.1} parent=5 // pred_fallthru
        _
      %p195 = scmp.le.s32.totalorder 1, %s13
      %p196 = scmp.lt.s32.totalorder %s13, 3
      %p197 = pnand %p195, %p196
      %p198 = pneg %p197
      // Predicated region
      $region33: #{tpu_custom_call.1} parent=5 // pred_check
        _
      $region34: #{tpu_custom_call.1} parent=5 // pred_check_branch
        %200 = sbr.rel (%p197) target = $region36
      $region35: #{tpu_custom_call.1} parent=5 // pred_region
        %s201 = ssub.s32 %s13, 1
        %p202 = scmp.lt.s32.totalorder %s22, 1
        %s203 = scalar_select %p202, %s22, 1
        %s204 = smul.addr %s203, 8
        %s205 = smul.addr %s204, 8
        %s206 = scalar_lea.vmem %s0, %s205
        %p207 = pneg %p51
        %p208 = pneg %p48
        %s209 = smul.u32 8, %s23
        %p210 = scmp.lt.s32.totalorder %s22, 1
        %s211 = scalar_select %p210, %s22, 1
        %p212 = scmp.lt.s32.totalorder %s209, 7
        %s213 = scalar_select %p212, %s209, 7
        %s214 = smul.addr %s211, 8
        %s215 = sadd.s32 %s213, %s214
        %s216 = smul.addr %s215, 8
        %s217 = scalar_lea.vmem %s1, %s216
        %p218 = pneg %p79
        %p219 = pneg %p76
        %p220 = pneg %p100
        %p221 = pneg %p97
        %p222 = pneg %p121
        %p223 = pneg %p118
        %p224 = pneg %p149
        %p225 = pneg %p146
        %s226 = sand.u32 %s136, 1
        %s227 = scalar_lea.sflag [#allocation4], %s226
        %s228 = sand.u32 %s136, 1
        %s229 = smul.addr %s228, 64
        %s230 = scalar_lea.vmem [#allocation3], %s229
        %p231 = scmp.lt.s32.totalorder %s22, 1
        %s232 = scalar_select %p231, %s22, 1
        %s233 = smul.addr %s232, 8
        %s234 = smul.addr %s233, 8
        %s235 = scalar_lea.vmem %s0, %s234
        %s236 = smul.u32 8, %s23
        %p237 = scmp.lt.s32.totalorder %s22, 1
        %s238 = scalar_select %p237, %s22, 1
        %p239 = scmp.lt.s32.totalorder %s236, 7
        %s240 = scalar_select %p239, %s236, 7
        %s241 = smul.addr %s238, 8
        %s242 = sadd.s32 %s240, %s241
        %s243 = smul.addr %s242, 8
        %s244 = scalar_lea.vmem %s1, %s243
        %s245 = smul.u32 8, %s23
        %s246 = smul.u32 8, %s23
        %p247 = scmp.eq.s32.totalorder %s23, 0
        // Predicated region
        $region37: #{tpu_custom_call.1} parent=35 // pred_check
          %p248 = pneg %p247
        $region38: #{tpu_custom_call.1} parent=35 // pred_check_branch
          %250 = sbr.rel (%p248) target = $region40
        $region39: #{tpu_custom_call.1} parent=35 // pred_region
          %v251 = vld [vmem:[%s235] sm:$0xff]
          %v252 = vld [vmem:[%s235 + $0x8] sm:$0xff]
          %v253 = vld [vmem:[%s235 + $0x10] sm:$0xff]
          %v254 = vld [vmem:[%s235 + $0x18] sm:$0xff]
          %v255 = vld [vmem:[%s235 + $0x20] sm:$0xff]
          %v256 = vld [vmem:[%s235 + $0x28] sm:$0xff]
          %v257 = vld [vmem:[%s235 + $0x30] sm:$0xff]
          %v258 = vld [vmem:[%s235 + $0x38] sm:$0xff]
          %v259 = vld [vmem:[%s2] sm:$0xff]
          %v260 = vld [vmem:[%s2 + $0x8] sm:$0xff]
          %v261 = vld [vmem:[%s2 + $0x10] sm:$0xff]
          %v262 = vld [vmem:[%s2 + $0x18] sm:$0xff]
          %vm263 = vcmask 261120
          %v265 = vsel %vm263, %v251, 0
          %v268 = vsel %vm263, %v252, 0
          %v271 = vsel %vm263, %v253, 0
          %v274 = vsel %vm263, %v254, 0
          %v277 = vsel %vm263, %v255, 0
          %v280 = vsel %vm263, %v256, 0
          %v283 = vsel %vm263, %v257, 0
          %v286 = vsel %vm263, %v258, 0
          %288 = vmatprep.subr.mxu0 0.0
          %289 = vmatpush1.msra.mxu0 0.0
          %290 = vmatprep.subr.mxu0 0.0
          %291 = vmatpush1.msra.mxu0 0.0
          %292 = vmatprep.subr.mxu0 0.0
          %293 = vmatpush1.msra.mxu0 0.0
          %294 = vmatprep.subr.mxu0 0.0
          %295 = vmatpush1.msra.mxu0 0.0
          %296 = vmatprep.subr.mxu0 0.0
          %297 = vmatpush1.msra.mxu0 0.0
          %298 = vmatprep.subr.mxu0 0.0
          %299 = vmatpush1.msra.mxu0 0.0
          %300 = vmatprep.subr.mxu0 0.0
          %301 = vmatpush1.msra.mxu0 0.0
          %302 = vmatprep.subr.mxu0 0.0
          %303 = vmatpush1.msra.mxu0 0.0
          %304 = vmatprep.subr.mxu0 0.0
          %305 = vmatpush1.msra.mxu0 0.0
          %306 = vmatprep.subr.mxu0 0.0
          %307 = vmatpush1.msra.mxu0 0.0
          %308 = vmatprep.subr.mxu0 0.0
          %309 = vmatpush1.msra.mxu0 0.0
          %310 = vmatprep.subr.mxu0 0.0
          %311 = vmatpush1.msra.mxu0 0.0
          %312 = vmatprep.subr.mxu0 0.0
          %313 = vmatpush1.msra.mxu0 %v262
          %314 = vmatprep.subr.mxu0 0.0
          %315 = vmatpush1.msra.mxu0 %v261
          %316 = vmatprep.subr.mxu0 0.0
          %317 = vmatpush1.msra.mxu0 %v260
          %318 = vmatprep.subr.mxu0 0.0
          %319 = vmatpush1.msra.mxu0 %v259
          %320 = vmatprep.subr.mxu0 0.0
          %321 = vmatpush2.msra.mxu0 0.0
          %322 = vmatprep.subr.mxu0 0.0
          %323 = vmatpush2.msra.mxu0 0.0
          %324 = vmatprep.subr.mxu0 0.0
          %325 = vmatpush2.msra.mxu0 0.0
          %326 = vmatprep.subr.mxu0 0.0
          %327 = vmatpush2.msra.mxu0 0.0
          %328 = vmatprep.subr.mxu0 0.0
          %329 = vmatpush2.msra.mxu0 0.0
          %330 = vmatprep.subr.mxu0 0.0
          %331 = vmatpush2.msra.mxu0 0.0
          %332 = vmatprep.subr.mxu0 0.0
          %333 = vmatpush2.msra.mxu0 0.0
          %334 = vmatprep.subr.mxu0 0.0
          %335 = vmatpush2.msra.mxu0 0.0
          %336 = vmatprep.subr.mxu0 0.0
          %337 = vmatpush2.msra.mxu0 0.0
          %338 = vmatprep.subr.mxu0 0.0
          %339 = vmatpush2.msra.mxu0 0.0
          %340 = vmatprep.subr.mxu0 0.0
          %341 = vmatpush2.msra.mxu0 0.0
          %342 = vmatprep.subr.mxu0 0.0
          %343 = vmatpush2.msra.mxu0 0.0
          %344 = vmatprep.subr.mxu0 0.0
          %345 = vmatpush2.msra.mxu0 0.0
          %346 = vmatprep.subr.mxu0 0.0
          %347 = vmatpush2.msra.mxu0 0.0
          %348 = vmatprep.subr.mxu0 0.0
          %349 = vmatpush2.msra.mxu0 0.0
          %350 = vmatprep.subr.mxu0 0.0
          %351 = vmatpush2.msra.mxu0 0.0
          %352 = vmatprep.mubr.f32.mxu0 0.0
          %353 = vmatmul.mubr.f32.gmra.mxu0 %v265
          %v354 = vpop.f32.mrf.mxu0
          %v355 = vadd.f32 0.0, %v354
          %v356 = vpop.f32.mrf.mxu0
          %357 = vmatprep.mubr.f32.mxu0 0.0
          %358 = vmatmul.mubr.f32.gmra.mxu0 %v268
          %v359 = vpop.f32.mrf.mxu0
          %v360 = vadd.f32 0.0, %v359
          %v361 = vpop.f32.mrf.mxu0
          %362 = vmatprep.mubr.f32.mxu0 0.0
          %363 = vmatmul.mubr.f32.gmra.mxu0 %v271
          %v364 = vpop.f32.mrf.mxu0
          %v365 = vadd.f32 0.0, %v364
          %v366 = vpop.f32.mrf.mxu0
          %367 = vmatprep.mubr.f32.mxu0 0.0
          %368 = vmatmul.mubr.f32.gmra.mxu0 %v274
          %v369 = vpop.f32.mrf.mxu0
          %v370 = vadd.f32 0.0, %v369
          %v371 = vpop.f32.mrf.mxu0
          %372 = vmatprep.mubr.f32.mxu0 0.0
          %373 = vmatmul.mubr.f32.gmra.mxu0 %v277
          %v374 = vpop.f32.mrf.mxu0
          %v375 = vadd.f32 0.0, %v374
          %v376 = vpop.f32.mrf.mxu0
          %377 = vmatprep.mubr.f32.mxu0 0.0
          %378 = vmatmul.mubr.f32.gmra.mxu0 %v280
          %v379 = vpop.f32.mrf.mxu0
          %v380 = vadd.f32 0.0, %v379
          %v381 = vpop.f32.mrf.mxu0
          %382 = vmatprep.mubr.f32.mxu0 0.0
          %383 = vmatmul.mubr.f32.gmra.mxu0 %v283
          %v384 = vpop.f32.mrf.mxu0
          %v385 = vadd.f32 0.0, %v384
          %v386 = vpop.f32.mrf.mxu0
          %387 = vmatprep.mubr.f32.mxu0 0.0
          %388 = vmatmul.mubr.f32.gmra.mxu0 %v286
          %v389 = vpop.f32.mrf.mxu0
          %v390 = vadd.f32 0.0, %v389
          %v391 = vpop.f32.mrf.mxu0
          %392 = vdwg.mxu0
          %393 = vst [vmem:[#allocation2] sm:$0xff] %v355
          %394 = vst [vmem:[#allocation2 + $0x8] sm:$0xff] %v360
          %395 = vst [vmem:[#allocation2 + $0x10] sm:$0xff] %v365
          %396 = vst [vmem:[#allocation2 + $0x18] sm:$0xff] %v370
          %397 = vst [vmem:[#allocation2 + $0x20] sm:$0xff] %v375
          %398 = vst [vmem:[#allocation2 + $0x28] sm:$0xff] %v380
          %399 = vst [vmem:[#allocation2 + $0x30] sm:$0xff] %v385
          %400 = vst [vmem:[#allocation2 + $0x38] sm:$0xff] %v390
        $region40: #{tpu_custom_call.1} parent=35 // pred_fallthru
          _
        %v401 = vld [vmem:[%s244] sm:$0xff]
        %v402 = vld [vmem:[%s244 + $0x8] sm:$0xff]
        %v403 = vld [vmem:[%s244 + $0x10] sm:$0xff]
        %v404 = vld [vmem:[%s244 + $0x18] sm:$0xff]
        %v405 = vld [vmem:[%s244 + $0x20] sm:$0xff]
        %v406 = vld [vmem:[%s244 + $0x28] sm:$0xff]
        %v407 = vld [vmem:[%s244 + $0x30] sm:$0xff]
        %v408 = vld [vmem:[%s244 + $0x38] sm:$0xff]
        %v409 = vld [vmem:[#allocation2] sm:$0xff]
        %v410 = vld [vmem:[#allocation2 + $0x8] sm:$0xff]
        %v411 = vld [vmem:[#allocation2 + $0x10] sm:$0xff]
        %v412 = vld [vmem:[#allocation2 + $0x18] sm:$0xff]
        %v413 = vld [vmem:[#allocation2 + $0x20] sm:$0xff]
        %v414 = vld [vmem:[#allocation2 + $0x28] sm:$0xff]
        %v415 = vld [vmem:[#allocation2 + $0x30] sm:$0xff]
        %v416 = vld [vmem:[#allocation2 + $0x38] sm:$0xff]
        %v417 = vld [vmem:[%s3] sm:$0x1]
        %v419 = vlaneseq
        %v420 = vshrl.u32 %v419, 7
        %v421 = vsub.s32 0, %v420
        %v422 = vrot.slane %v417, %v421
        %vm424 = vcmask 523264
        %v426 = vsel %vm424, %v401, 0
        %v429 = vsel %vm424, %v402, 0
        %v432 = vsel %vm424, %v403, 0
        %v435 = vsel %vm424, %v404, 0
        %v438 = vsel %vm424, %v405, 0
        %v441 = vsel %vm424, %v406, 0
        %v444 = vsel %vm424, %v407, 0
        %v447 = vsel %vm424, %v408, 0
        %449 = vmatprep.subr.mxu0 0.0
        %450 = vmatpush1.msra.mxu0 0.0
        %451 = vmatprep.subr.mxu0 0.0
        %452 = vmatpush1.msra.mxu0 0.0
        %453 = vmatprep.subr.mxu0 0.0
        %454 = vmatpush1.msra.mxu0 0.0
        %455 = vmatprep.subr.mxu0 0.0
        %456 = vmatpush1.msra.mxu0 0.0
        %457 = vmatprep.subr.mxu0 0.0
        %458 = vmatpush1.msra.mxu0 0.0
        %459 = vmatprep.subr.mxu0 0.0
        %460 = vmatpush1.msra.mxu0 0.0
        %461 = vmatprep.subr.mxu0 0.0
        %462 = vmatpush1.msra.mxu0 0.0
        %463 = vmatprep.subr.mxu0 0.0
        %464 = vmatpush1.msra.mxu0 0.0
        %465 = vmatprep.subr.mxu0 0.0
        %466 = vmatpush1.msra.mxu0 %v416
        %467 = vmatprep.subr.mxu0 0.0
        %468 = vmatpush1.msra.mxu0 %v415
        %469 = vmatprep.subr.mxu0 0.0
        %470 = vmatpush1.msra.mxu0 %v414
        %471 = vmatprep.subr.mxu0 0.0
        %472 = vmatpush1.msra.mxu0 %v413
        %473 = vmatprep.subr.mxu0 0.0
        %474 = vmatpush1.msra.mxu0 %v412
        %475 = vmatprep.subr.mxu0 0.0
        %476 = vmatpush1.msra.mxu0 %v411
        %477 = vmatprep.subr.mxu0 0.0
        %478 = vmatpush1.msra.mxu0 %v410
        %479 = vmatprep.subr.mxu0 0.0
        %480 = vmatpush1.msra.mxu0 %v409
        %481 = vmatprep.subr.mxu0 0.0
        %482 = vmatpush2.msra.mxu0 0.0
        %483 = vmatprep.subr.mxu0 0.0
        %484 = vmatpush2.msra.mxu0 0.0
        %485 = vmatprep.subr.mxu0 0.0
        %486 = vmatpush2.msra.mxu0 0.0
        %487 = vmatprep.subr.mxu0 0.0
        %488 = vmatpush2.msra.mxu0 0.0
        %489 = vmatprep.subr.mxu0 0.0
        %490 = vmatpush2.msra.mxu0 0.0
        %491 = vmatprep.subr.mxu0 0.0
        %492 = vmatpush2.msra.mxu0 0.0
        %493 = vmatprep.subr.mxu0 0.0
        %494 = vmatpush2.msra.mxu0 0.0
        %495 = vmatprep.subr.mxu0 0.0
        %496 = vmatpush2.msra.mxu0 0.0
        %497 = vmatprep.subr.mxu0 0.0
        %498 = vmatpush2.msra.mxu0 0.0
        %499 = vmatprep.subr.mxu0 0.0
        %500 = vmatpush2.msra.mxu0 0.0
        %501 = vmatprep.subr.mxu0 0.0
        %502 = vmatpush2.msra.mxu0 0.0
        %503 = vmatprep.subr.mxu0 0.0
        %504 = vmatpush2.msra.mxu0 0.0
        %505 = vmatprep.subr.mxu0 0.0
        %506 = vmatpush2.msra.mxu0 0.0
        %507 = vmatprep.subr.mxu0 0.0
        %508 = vmatpush2.msra.mxu0 0.0
        %509 = vmatprep.subr.mxu0 0.0
        %510 = vmatpush2.msra.mxu0 0.0
        %511 = vmatprep.subr.mxu0 0.0
        %512 = vmatpush2.msra.mxu0 0.0
        %513 = vmatprep.mubr.f32.mxu0 0.0
        %514 = vmatmul.mubr.f32.gmra.mxu0 %v426
        %v515 = vpop.f32.mrf.mxu0
        %v516 = vadd.f32 %v422, %v515
        %v517 = vpop.f32.mrf.mxu0
        %518 = vmatprep.mubr.f32.mxu0 0.0
        %519 = vmatmul.mubr.f32.gmra.mxu0 %v429
        %v520 = vpop.f32.mrf.mxu0
        %v521 = vadd.f32 %v422, %v520
        %v522 = vpop.f32.mrf.mxu0
        %523 = vmatprep.mubr.f32.mxu0 0.0
        %524 = vmatmul.mubr.f32.gmra.mxu0 %v432
        %v525 = vpop.f32.mrf.mxu0
        %v526 = vadd.f32 %v422, %v525
        %v527 = vpop.f32.mrf.mxu0
        %528 = vmatprep.mubr.f32.mxu0 0.0
        %529 = vmatmul.mubr.f32.gmra.mxu0 %v435
        %v530 = vpop.f32.mrf.mxu0
        %v531 = vadd.f32 %v422, %v530
        %v532 = vpop.f32.mrf.mxu0
        %533 = vmatprep.mubr.f32.mxu0 0.0
        %534 = vmatmul.mubr.f32.gmra.mxu0 %v438
        %v535 = vpop.f32.mrf.mxu0
        %v536 = vadd.f32 %v422, %v535
        %v537 = vpop.f32.mrf.mxu0
        %538 = vmatprep.mubr.f32.mxu0 0.0
        %539 = vmatmul.mubr.f32.gmra.mxu0 %v441
        %v540 = vpop.f32.mrf.mxu0
        %v541 = vadd.f32 %v422, %v540
        %v542 = vpop.f32.mrf.mxu0
        %543 = vmatprep.mubr.f32.mxu0 0.0
        %544 = vmatmul.mubr.f32.gmra.mxu0 %v444
        %v545 = vpop.f32.mrf.mxu0
        %v546 = vadd.f32 %v422, %v545
        %v547 = vpop.f32.mrf.mxu0
        %548 = vmatprep.mubr.f32.mxu0 0.0
        %549 = vmatmul.mubr.f32.gmra.mxu0 %v447
        %v550 = vpop.f32.mrf.mxu0
        %v551 = vadd.f32 %v422, %v550
        %v552 = vpop.f32.mrf.mxu0
        %553 = vdwg.mxu0
        %vm554 = vcmp.ge.f32.partialorder %v516, 0.0
        %vm555 = vcmp.ge.f32.partialorder %v521, 0.0
        %vm556 = vcmp.ge.f32.partialorder %v526, 0.0
        %vm557 = vcmp.ge.f32.partialorder %v531, 0.0
        %vm558 = vcmp.ge.f32.partialorder %v536, 0.0
        %vm559 = vcmp.ge.f32.partialorder %v541, 0.0
        %vm560 = vcmp.ge.f32.partialorder %v546, 0.0
        %vm561 = vcmp.ge.f32.partialorder %v551, 0.0
        %v562 = vmul.f32 %v516, 0.2
        %v563 = vmul.f32 %v521, 0.2
        %v564 = vmul.f32 %v526, 0.2
        %v565 = vmul.f32 %v531, 0.2
        %v566 = vmul.f32 %v536, 0.2
        %v567 = vmul.f32 %v541, 0.2
        %v568 = vmul.f32 %v546, 0.2
        %v569 = vmul.f32 %v551, 0.2
        %v570 = vsel %vm554, %v516, %v562
        %v571 = vsel %vm555, %v521, %v563
        %v572 = vsel %vm556, %v526, %v564
        %v573 = vsel %vm557, %v531, %v565
        %v574 = vsel %vm558, %v536, %v566
        %v575 = vsel %vm559, %v541, %v567
        %v576 = vsel %vm560, %v546, %v568
        %v577 = vsel %vm561, %v551, %v569
        %578 = vst [vmem:[%s230] sm:$0xff] %v570
        %579 = vst [vmem:[%s230 + $0x8] sm:$0xff] %v571
        %580 = vst [vmem:[%s230 + $0x10] sm:$0xff] %v572
        %581 = vst [vmem:[%s230 + $0x18] sm:$0xff] %v573
        %582 = vst [vmem:[%s230 + $0x20] sm:$0xff] %v574
        %583 = vst [vmem:[%s230 + $0x28] sm:$0xff] %v575
        %584 = vst [vmem:[%s230 + $0x30] sm:$0xff] %v576
        %585 = vst [vmem:[%s230 + $0x38] sm:$0xff] %v577
        %s586 = sand.u32 %s136, 1
        %s587 = scalar_lea.sflag [#allocation4], %s586
        %s588 = sand.u32 %s136, 1
        %s589 = smul.addr %s588, 64
        %s590 = scalar_lea.vmem [#allocation3], %s589
        // Predicated region
        $region41: #{tpu_custom_call.1} parent=35 // pred_check
          %p591 = pneg %p146
        $region42: #{tpu_custom_call.1} parent=35 // pred_check_branch
          %593 = sbr.rel (%p591) target = $region44
        $region43: #{tpu_custom_call.1} parent=35 // pred_region
          %s594 = smul.u32 8, %s23
          %s596 = ssub.s32 1024, 1024
          %597 = vsyncadd %s587, %s596
          %s598 = smul.addr %s22, 8
          %s599 = sadd.s32 %s594, %s598
          %s600 = smul.addr %s599, 128
          %s601 = scalar_lea.hbm %s4, %s600
          %s602 = sshll.u32 %s590, 4
          %s603 = int_to_ptr.vmem [resolvable:$true] %s602
          %608 = dma.vmem_to_hbm [thread:$0]  %s603, 1024, %s601, %s587, 128, 128, 8
        $region44: #{tpu_custom_call.1} parent=35 // pred_fallthru
          _
      $region36: #{tpu_custom_call.1} parent=5 // pred_fallthru
        _
      %p609 = scmp.le.s32.totalorder 2, %s13
      // Predicated region
      $region45: #{tpu_custom_call.1} parent=5 // pred_check
        %p610 = pneg %p609
      $region46: #{tpu_custom_call.1} parent=5 // pred_check_branch
        %612 = sbr.rel (%p610) target = $region48
      $region47: #{tpu_custom_call.1} parent=5 // pred_region
        %s613 = ssub.s32 %s13, 2
        // Predicated region
        $region49: #{tpu_custom_call.1} parent=47 // pred_check
          %p614 = pneg %p152
        $region50: #{tpu_custom_call.1} parent=47 // pred_check_branch
          %616 = sbr.rel (%p614) target = $region52
        $region51: #{tpu_custom_call.1} parent=47 // pred_region
          %s617 = sand.u32 %s137, 1
          %s618 = scalar_lea.sflag [#allocation4], %s617
          %s619 = sand.u32 %s137, 1
          %s620 = smul.addr %s619, 64
          %s621 = scalar_lea.vmem [#allocation3], %s620
          %622 = dma.done %s618, 1024
        $region52: #{tpu_custom_call.1} parent=47 // pred_fallthru
          _
      $region48: #{tpu_custom_call.1} parent=5 // pred_fallthru
        _
    $region6: #{tpu_custom_call.1} parent=1 // loop_footer
      %s17 = sadd.s32 1, %s13
    $region7: #{tpu_custom_call.1} parent=1 // loop_footer_branch
      %12 = sbr.rel target = $region3
    $region8: #{tpu_custom_call.1} parent=1 // loop_exit
      _
    %623 = vsyncpa [#allocation4], 1
    %s624 = scalar_lea.sflag [#allocation4], 1
    %625 = vsyncpa %s624, 1

</llo_original>
